<compile_context>
chip_gen: v5e
topology: v5e:2x2
jax: 0.10.0
libtpu: 0.0.40
codegen_flags: <defaults>
</compile_context>

<pallas_src>
import functools

import jax
import jax.numpy as jnp
from jax import lax
from jax.experimental import pallas as pl
from jax.experimental.pallas import tpu as pltpu


# ----------------------------------------------------------------------------
# Kernel
# ----------------------------------------------------------------------------
def _bert_output_kernel(hs_ref, inp_ref, w_ref, b_ref, gamma_ref, beta_ref,
                        out_ref, acc_ref, *, eps):
    """One (tile_m, tile_k) grid step of LayerNorm(hs @ W + b + inp).

    hs_ref:    (tile_m, tile_k) bf16   current row/K tile of the activations
    inp_ref:   (tile_m, H)      f32    residual input tile (constant over k)
    w_ref:     (tile_k, H)      bf16   weight slab for this K step
    b/gamma/beta: (1, H)        f32    resident parameters
    acc_ref:   (tile_m, H)      f32    VMEM accumulator scratch
    """
    k = pl.program_id(1)

    @pl.when(k == 0)
    def _init():
        acc_ref[...] = jnp.zeros_like(acc_ref)

    # bf16 x bf16 -> f32 accumulation on the MXU.
    acc_ref[...] += jnp.dot(hs_ref[...], w_ref[...],
                            preferred_element_type=jnp.float32)

    @pl.when(k == pl.num_programs(1) - 1)
    def _epilogue():
        resid = acc_ref[...] + b_ref[...] + inp_ref[...]
        inv_h = 1.0 / resid.shape[-1]
        # One-pass LayerNorm statistics (biased variance, torch semantics).
        s1 = jnp.sum(resid, axis=-1, keepdims=True)
        s2 = jnp.sum(resid * resid, axis=-1, keepdims=True)
        mu = s1 * inv_h
        var = jnp.maximum(s2 * inv_h - mu * mu, 0.0)
        normed = (resid - mu) * lax.rsqrt(var + eps)        # rsqrt -> EUP slot
        out_ref[...] = (normed * gamma_ref[...] + beta_ref[...]).astype(out_ref.dtype)


# ----------------------------------------------------------------------------
# Tiling / VMEM budgeting helpers
# ----------------------------------------------------------------------------
def _round_up(x, m):
    return ((x + m - 1) // m) * m


def _vmem_capacity_bytes():
    try:
        return int(pltpu.get_tpu_info().vmem_capacity_bytes)
    except Exception:
        return 64 << 20  # conservative fallback: v7x per-TensorCore VMEM


def _estimate_vmem_bytes(tile_m, tile_k, H, kb):
    """Working-set estimate for one grid step (incl. double-buffering)."""
    w_bufs = 1 if kb == 1 else 2              # resident weight single-buffered
    w = tile_k * H * 2 * w_bufs               # bf16 weight slab(s)
    hs = tile_m * tile_k * 2 * 2              # bf16 activations, double-buffer
    inp = tile_m * H * 4 * 2                  # f32 residual input
    out = tile_m * H * 4 * 2                  # f32 output
    acc = tile_m * H * 4                      # f32 accumulator scratch
    small = 3 * max(H, 128) * 4               # bias / gamma / beta
    return w + hs + inp + out + acc + small


def _pick_tile_k(I_pad, H, budget_bytes=8 << 20):
    """Whole weight resident when small; otherwise a ~<=8 MiB bf16 slab."""
    if I_pad <= 128 or I_pad * H * 2 <= budget_bytes:
        return I_pad
    best = 128
    t = 256
    while t <= I_pad:
        if I_pad % t == 0 and t * H * 2 <= budget_bytes:
            best = t
        t += 128
    return best


def _pick_tile_m(M, tile_k, H, kb, cap):
    """Biggest row tile whose working set fits the VMEM budget."""
    m_cap = _round_up(M, 8)
    margin = 8 << 20
    for cand in (512, 256, 128, 64, 32, 16, 8):
        tm = min(cand, m_cap)
        if _estimate_vmem_bytes(tm, tile_k, H, kb) + margin <= cap:
            return tm
    return 8


def _spec(shape, index_map, single_buffer=False):
    """BlockSpec; constant-index resident operands get single-buffering so the
    weight / LN params are not allocated twice in VMEM."""
    if single_buffer:
        try:
            return pl.BlockSpec(shape, index_map, pipeline_mode=pl.Buffered(1))
        except Exception:  # API without pipeline_mode -> fall back to default
            pass
    return pl.BlockSpec(shape, index_map)


# ----------------------------------------------------------------------------
# Wrapper
# ----------------------------------------------------------------------------
def bert_output(hidden_states, input_tensor, params, *, layer_norm_eps,
                tile_m=None, tile_k=None):
    """hidden_states: (B, S, I), input_tensor: (B, S, H), both f32.

    params: {"w": (I, H) pre-transposed dense weight, "b": (1, H),
             "gamma": (1, H), "beta": (1, H)}   (all f32)
    Returns (B, S, H) f32.
    """
    B, S, I = hidden_states.shape
    H = input_tensor.shape[-1]
    M = B * S

    # Flatten batch*seq into one row axis: lane/sublane-dense slabs, fewer
    # grid steps, one kernel shape regardless of the B vs S split.
    hs2 = hidden_states.reshape(M, I)
    inp2 = input_tensor.reshape(M, H).astype(jnp.float32)
    w = params["w"]

    # ---- contraction axis: pad to a multiple of 128 lanes if needed --------
    I_pad = _round_up(I, 128) if I > 128 else I
    if I_pad != I:
        hs2 = jnp.pad(hs2, ((0, 0), (0, I_pad - I)))
        w = jnp.pad(w, ((0, I_pad - I), (0, 0)))

    if tile_k is None:
        tile_k = _pick_tile_k(I_pad, H)
    assert I_pad % tile_k == 0, "tile_k must divide the (padded) intermediate dim"
    kb = I_pad // tile_k

    cap = _vmem_capacity_bytes()
    if tile_m is None:
        tile_m = _pick_tile_m(M, tile_k, H, kb, cap)
    tile_m = max(8, _round_up(tile_m, 8))

    # ---- row axis: pad B*S up to a multiple of tile_m (dense tiles always) -
    M_pad = _round_up(M, tile_m)
    if M_pad != M:
        hs2 = jnp.pad(hs2, ((0, M_pad - M), (0, 0)))
        inp2 = jnp.pad(inp2, ((0, M_pad - M), (0, 0)))

    # bf16 MXU operands; everything else stays f32.
    hs_bf = hs2.astype(jnp.bfloat16)
    w_bf = w.astype(jnp.bfloat16)
    b = params["b"].astype(jnp.float32)
    gamma = params["gamma"].astype(jnp.float32)
    beta = params["beta"].astype(jnp.float32)

    est = _estimate_vmem_bytes(tile_m, tile_k, H, kb)
    vmem_limit = int(min(cap, max(32 << 20, int(est * 1.3) + (2 << 20))))

    grid = (M_pad // tile_m, kb)
    kernel = functools.partial(_bert_output_kernel, eps=layer_norm_eps)

    out2 = pl.pallas_call(
        kernel,
        out_shape=jax.ShapeDtypeStruct((M_pad, H), jnp.float32),
        grid_spec=pltpu.PrefetchScalarGridSpec(
            num_scalar_prefetch=0,
            grid=grid,
            in_specs=[
                pl.BlockSpec((tile_m, tile_k), lambda i, k: (i, k)),   # hs (bf16)
                pl.BlockSpec((tile_m, H), lambda i, k: (i, 0)),        # residual in
                _spec((tile_k, H), lambda i, k: (k, 0),
                      single_buffer=(kb == 1)),                        # weight
                _spec((1, H), lambda i, k: (0, 0), single_buffer=True),  # bias
                _spec((1, H), lambda i, k: (0, 0), single_buffer=True),  # gamma
                _spec((1, H), lambda i, k: (0, 0), single_buffer=True),  # beta
            ],
            out_specs=pl.BlockSpec((tile_m, H), lambda i, k: (i, 0)),
            scratch_shapes=[pltpu.VMEM((tile_m, H), jnp.float32)],
        ),
        compiler_params=pltpu.CompilerParams(
            dimension_semantics=("parallel", "arbitrary"),
            vmem_limit_bytes=vmem_limit),
    )(hs_bf, inp2, w_bf, b, gamma, beta)

    return out2[:M].reshape(B, S, H)


# ----------------------------------------------------------------------------
# Pure-JAX reference (mirrors PyTorch BertOutput semantics)
# ----------------------------------------------------------------------------
def _reference(hidden_states, input_tensor, params, *, layer_norm_eps,
               matmul_dtype=jnp.float32):
    hs = hidden_states.astype(matmul_dtype)
    w = params["w"].astype(matmul_dtype)
    dense = jnp.dot(hs, w, preferred_element_type=jnp.float32) + params["b"][0]
    resid = dense + input_tensor
    mu = jnp.mean(resid, axis=-1, keepdims=True)
    var = jnp.mean((resid - mu) ** 2, axis=-1, keepdims=True)
    normed = (resid - mu) / jnp.sqrt(var + layer_norm_eps)
    return normed * params["gamma"][0] + params["beta"][0]


# ----------------------------------------------------------------------------
# Self-test
# ----------------------------------------------------------------------------
if __name__ == "__main__":
    LAYER_NORM_EPS = 1e-12
    key = jax.random.PRNGKey(0)

    def run_case(B, S, I, H, *, tile_m=None, tile_k=None):
        ks = jax.random.split(key, 6)
        params = {
            # pre-transposed: (in_features, out_features) = (I, H)
            "w": jax.random.normal(ks[0], (I, H), jnp.float32) * 0.05,
            "b": jax.random.normal(ks[1], (1, H), jnp.float32) * 0.02,
            "gamma": 1.0 + 0.1 * jax.random.normal(ks[2], (1, H), jnp.float32),
            "beta": 0.02 * jax.random.normal(ks[3], (1, H), jnp.float32),
        }
        hidden_states = jax.random.normal(ks[4], (B, S, I), jnp.float32)
        input_tensor = jax.random.normal(ks[5], (B, S, H), jnp.float32)

        out = bert_output(hidden_states, input_tensor, params,
                          layer_norm_eps=LAYER_NORM_EPS,
                          tile_m=tile_m, tile_k=tile_k)
        out = jax.block_until_ready(out)

        # Precision-matched reference (bf16 MXU operands, f32 accum / LN).
        ref = _reference(hidden_states, input_tensor, params,
                         layer_norm_eps=LAYER_NORM_EPS,
                         matmul_dtype=jnp.bfloat16)
        assert out.shape == (B, S, H)
        assert jnp.allclose(out, ref, atol=2e-3, rtol=2e-3), (
            f"mismatch vs reference for B={B} S={S} I={I} H={H}")

    # Small shapes consistent with the module (hidden=32, intermediate=4*32).
    run_case(B=2, S=8, I=128, H=32)
    # Exercises row padding (2*13 -> 32 rows) and the K-tiled accumulator path.
    run_case(B=2, S=13, I=384, H=128, tile_m=16, tile_k=128)

    # TODO(synk): save_tensor_as_bin debug dumps in the PyTorch module are host
    # file-I/O side effects with no kernel equivalent; intentionally omitted.
    print("KERNEL_OK")
</pallas_src>

<mosaic_0001>
module attributes {stable_mosaic.version = 11 : i64} {
  func.func @_bert_output_kernel(%arg0: i32, %arg1: i32, %arg2: memref<16x128xbf16, #tpu.memory_space<vmem>>, %arg3: memref<16x32xf32, #tpu.memory_space<vmem>>, %arg4: memref<128x32xbf16, #tpu.memory_space<vmem>>, %arg5: memref<1x32xf32, #tpu.memory_space<vmem>>, %arg6: memref<1x32xf32, #tpu.memory_space<vmem>>, %arg7: memref<1x32xf32, #tpu.memory_space<vmem>>, %arg8: memref<16x32xf32, #tpu.memory_space<vmem>>, %arg9: memref<16x32xf32, #tpu.memory_space<vmem>>) attributes {dimension_semantics = [#tpu.dimension_semantics<parallel>, #tpu.dimension_semantics<arbitrary>], iteration_bounds = array<i64: 1, 1>, scalar_prefetch = 0 : i64, scratch_operands = 1 : i64, tpu.core_type = #tpu.core_type<tc>, window_params = [{transform_indices = @transform_0, window_bounds = array<i64: 16, 128>}, {transform_indices = @transform_1, window_bounds = array<i64: 16, 32>}, {pipeline_mode = #tpu.pipeline_mode<synchronous>, transform_indices = @transform_2, window_bounds = array<i64: 128, 32>}, {pipeline_mode = #tpu.pipeline_mode<synchronous>, transform_indices = @transform_3, window_bounds = array<i64: 1, 32>}, {pipeline_mode = #tpu.pipeline_mode<synchronous>, transform_indices = @transform_4, window_bounds = array<i64: 1, 32>}, {pipeline_mode = #tpu.pipeline_mode<synchronous>, transform_indices = @transform_5, window_bounds = array<i64: 1, 32>}, {transform_indices = @transform_6, window_bounds = array<i64: 16, 32>}]} {
    %c0_i32 = arith.constant 0 : i32
    %0 = arith.cmpi eq, %arg1, %c0_i32 : i32
    %1 = arith.extui %0 : i1 to i32
    %c0_i32_0 = arith.constant 0 : i32
    %2 = arith.cmpi ne, %1, %c0_i32_0 : i32
    scf.if %2 {
      %cst_10 = arith.constant 0.000000e+00 : f32
      %12 = vector.broadcast %cst_10 : f32 to vector<16x32xf32>
      %c0_11 = arith.constant 0 : index
      %c0_12 = arith.constant 0 : index
      %13 = vector.load %arg9[%c0_11, %c0_12] : memref<16x32xf32, #tpu.memory_space<vmem>>, vector<16x32xf32>
      tpu.vector_store %arg9[%c0_11, %c0_12], %12 {strides = array<i32>} : memref<16x32xf32, #tpu.memory_space<vmem>>, vector<16x32xf32>,
    } else {
    }
    %c0 = arith.constant 0 : index
    %c0_1 = arith.constant 0 : index
    %3 = vector.load %arg9[%c0, %c0_1] : memref<16x32xf32, #tpu.memory_space<vmem>>, vector<16x32xf32>
    %c0_2 = arith.constant 0 : index
    %c0_3 = arith.constant 0 : index
    %4 = vector.load %arg2[%c0_2, %c0_3] : memref<16x128xbf16, #tpu.memory_space<vmem>>, vector<16x128xbf16>
    %c0_4 = arith.constant 0 : index
    %c0_5 = arith.constant 0 : index
    %5 = vector.load %arg4[%c0_4, %c0_5] : memref<128x32xbf16, #tpu.memory_space<vmem>>, vector<128x32xbf16>
    %cst = arith.constant dense<0.000000e+00> : vector<16x32xf32>
    %6 = tpu.matmul %4, %5, %cst {dimension_numbers = #tpu.dot_dimension_numbers<[1], [0], [0], [1], [0, 0, 1, 1], [], []>} : vector<16x128xbf16>, vector<128x32xbf16>, vector<16x32xf32> -> vector<16x32xf32>
    %7 = arith.addf %3, %6 : vector<16x32xf32>
    %c0_6 = arith.constant 0 : index
    %c0_7 = arith.constant 0 : index
    %8 = vector.load %arg9[%c0_6, %c0_7] : memref<16x32xf32, #tpu.memory_space<vmem>>, vector<16x32xf32>
    tpu.vector_store %arg9[%c0_6, %c0_7], %7 {strides = array<i32>} : memref<16x32xf32, #tpu.memory_space<vmem>>, vector<16x32xf32>,
    %c0_i32_8 = arith.constant 0 : i32
    %9 = arith.cmpi eq, %arg1, %c0_i32_8 : i32
    %10 = arith.extui %9 : i1 to i32
    %c0_i32_9 = arith.constant 0 : i32
    %11 = arith.cmpi ne, %10, %c0_i32_9 : i32
    scf.if %11 {
      %c0_10 = arith.constant 0 : index
      %c0_11 = arith.constant 0 : index
      %12 = vector.load %arg9[%c0_10, %c0_11] : memref<16x32xf32, #tpu.memory_space<vmem>>, vector<16x32xf32>
      %c0_12 = arith.constant 0 : index
      %c0_13 = arith.constant 0 : index
      %13 = vector.load %arg5[%c0_12, %c0_13] : memref<1x32xf32, #tpu.memory_space<vmem>>, vector<1x32xf32>
      %14 = vector.broadcast %13 : vector<1x32xf32> to vector<16x32xf32>
      %15 = arith.addf %12, %14 : vector<16x32xf32>
      %c0_14 = arith.constant 0 : index
      %c0_15 = arith.constant 0 : index
      %16 = vector.load %arg3[%c0_14, %c0_15] : memref<16x32xf32, #tpu.memory_space<vmem>>, vector<16x32xf32>
      %17 = arith.addf %15, %16 : vector<16x32xf32>
      %cst_16 = arith.constant dense<0.000000e+00> : vector<16xf32>
      %18 = vector.multi_reduction <add>, %17, %cst_16 [1] : vector<16x32xf32> to vector<16xf32>
      %19 = vector.shape_cast %18 : vector<16xf32> to vector<16x1xf32>
      %20 = arith.mulf %17, %17 : vector<16x32xf32>
      %cst_17 = arith.constant dense<0.000000e+00> : vector<16xf32>
      %21 = vector.multi_reduction <add>, %20, %cst_17 [1] : vector<16x32xf32> to vector<16xf32>
      %22 = vector.shape_cast %21 : vector<16xf32> to vector<16x1xf32>
      %cst_18 = arith.constant 3.125000e-02 : f32
      %23 = vector.broadcast %cst_18 : f32 to vector<16x1xf32>
      %24 = arith.mulf %19, %23 : vector<16x1xf32>
      %cst_19 = arith.constant 3.125000e-02 : f32
      %25 = vector.broadcast %cst_19 : f32 to vector<16x1xf32>
      %26 = arith.mulf %22, %25 : vector<16x1xf32>
      %27 = arith.mulf %24, %24 : vector<16x1xf32>
      %28 = arith.subf %26, %27 : vector<16x1xf32>
      %cst_20 = arith.constant 0.000000e+00 : f32
      %29 = vector.broadcast %cst_20 : f32 to vector<16x1xf32>
      %30 = arith.maximumf %28, %29 : vector<16x1xf32>
      %31 = vector.broadcast %24 : vector<16x1xf32> to vector<16x32xf32>
      %32 = arith.subf %17, %31 : vector<16x32xf32>
      %cst_21 = arith.constant 9.99999996E-13 : f32
      %33 = vector.broadcast %cst_21 : f32 to vector<16x1xf32>
      %34 = arith.addf %30, %33 : vector<16x1xf32>
      %35 = math.rsqrt %34 : vector<16x1xf32>
      %36 = vector.broadcast %35 : vector<16x1xf32> to vector<16x32xf32>
      %37 = arith.mulf %32, %36 : vector<16x32xf32>
      %c0_22 = arith.constant 0 : index
      %c0_23 = arith.constant 0 : index
      %38 = vector.load %arg6[%c0_22, %c0_23] : memref<1x32xf32, #tpu.memory_space<vmem>>, vector<1x32xf32>
      %39 = vector.broadcast %38 : vector<1x32xf32> to vector<16x32xf32>
      %40 = arith.mulf %37, %39 : vector<16x32xf32>
      %c0_24 = arith.constant 0 : index
      %c0_25 = arith.constant 0 : index
      %41 = vector.load %arg7[%c0_24, %c0_25] : memref<1x32xf32, #tpu.memory_space<vmem>>, vector<1x32xf32>
      %42 = vector.broadcast %41 : vector<1x32xf32> to vector<16x32xf32>
      %43 = arith.addf %40, %42 : vector<16x32xf32>
      %c0_26 = arith.constant 0 : index
      %c0_27 = arith.constant 0 : index
      %44 = vector.load %arg8[%c0_26, %c0_27] : memref<16x32xf32, #tpu.memory_space<vmem>>, vector<16x32xf32>
      tpu.vector_store %arg8[%c0_26, %c0_27], %43 {strides = array<i32>} : memref<16x32xf32, #tpu.memory_space<vmem>>, vector<16x32xf32>,
    } else {
    }
    return
  }
  func.func @transform_0(%arg0: i32, %arg1: i32) -> (i32, i32) {
    %c0_i32 = arith.constant 0 : i32
    return %arg0, %arg1 : i32, i32
  }
  func.func @transform_1(%arg0: i32, %arg1: i32) -> (i32, i32) {
    %c0_i32 = arith.constant 0 : i32
    %c0_i32_0 = arith.constant 0 : i32
    return %arg0, %c0_i32 : i32, i32
  }
  func.func @transform_2(%arg0: i32, %arg1: i32) -> (i32, i32) {
    %c0_i32 = arith.constant 0 : i32
    %c0_i32_0 = arith.constant 0 : i32
    return %arg1, %c0_i32 : i32, i32
  }
  func.func @transform_3(%arg0: i32, %arg1: i32) -> (i32, i32) {
    %c0_i32 = arith.constant 0 : i32
    %c0_i32_0 = arith.constant 0 : i32
    %c0_i32_1 = arith.constant 0 : i32
    return %c0_i32, %c0_i32_0 : i32, i32
  }
  func.func @transform_4(%arg0: i32, %arg1: i32) -> (i32, i32) {
    %c0_i32 = arith.constant 0 : i32
    %c0_i32_0 = arith.constant 0 : i32
    %c0_i32_1 = arith.constant 0 : i32
    return %c0_i32, %c0_i32_0 : i32, i32
  }
  func.func @transform_5(%arg0: i32, %arg1: i32) -> (i32, i32) {
    %c0_i32 = arith.constant 0 : i32
    %c0_i32_0 = arith.constant 0 : i32
    %c0_i32_1 = arith.constant 0 : i32
    return %c0_i32, %c0_i32_0 : i32, i32
  }
  func.func @transform_6(%arg0: i32, %arg1: i32) -> (i32, i32) {
    %c0_i32 = arith.constant 0 : i32
    %c0_i32_0 = arith.constant 0 : i32
    return %arg0, %c0_i32 : i32, i32
  }
}

</mosaic_0001>

<llo_original>
// kernel: tpu_custom_call.1
$region0: #{tpu_custom_call.1}
  #allocation0 [shape = 'u32[]', space=smem, size = 0x4, offset = 0x4, fixed_abs, tag = 'smem constant byte address 0x4 - core index']
  #allocation1 [shape = 'u32[72,128]{1,0:T(1,128)}', space=vmem, size = 0x9000, scoped, tag = 'internal scratch']
  #allocation2 [shape = 'f32[16,32]{1,0:T(8,128)}', space=vmem, size = 0x2000, scoped, tag = 'scratch operand']
  %s0 = inlined_call_operand.vmem [shape: bf16[16,128], index: 0, kind: input, shape index: {}]
  %s1 = inlined_call_operand.vmem [shape: f32[16,32], index: 1, kind: input, shape index: {}]
  %s2 = inlined_call_operand.vmem [shape: bf16[128,32], index: 2, kind: input, shape index: {}]
  %s3 = inlined_call_operand.vmem [shape: f32[1,32], index: 3, kind: input, shape index: {}]
  %s4 = inlined_call_operand.vmem [shape: f32[1,32], index: 4, kind: input, shape index: {}]
  %s5 = inlined_call_operand.vmem [shape: f32[1,32], index: 5, kind: input, shape index: {}]
  %s6 = inlined_call_operand.hbm [shape: f32[16,32], index: 6, kind: output, shape index: {}]
  %s7 = sld [smem:[#allocation0]]
  $region42: #{tpu_custom_call.1} parent=0
    _
  %s9 = ssub.s32 1, %s7
  %s10 = scalar_select 0, %s9, %s7
  $region1: #{tpu_custom_call.1} parent=0
    #allocation3 [shape = 'u8[8192]{0}', space=vmem, size = 0x2000, scoped, tag = 'output window, operand 0, single buffered']
    #allocation4 [shape = 's32[1]{0}', space=sflag, size = 0x4, scoped, tag = 'scoped memory for tpu_custom_call.1']
    %11 = vsyncpa [#allocation4], 0
    // Predicated region
    $region2: #{tpu_custom_call.1} parent=1 // pred_check
      _
    $region3: #{tpu_custom_call.1} parent=1 // pred_check_branch
      %13 = sbr.rel (0) target = $region5
    $region4: #{tpu_custom_call.1} parent=1 // pred_region
      _
    $region5: #{tpu_custom_call.1} parent=1 // pred_fallthru
      _
    // Predicated region
    $region6: #{tpu_custom_call.1} parent=1 // pred_check
      _
    $region7: #{tpu_custom_call.1} parent=1 // pred_check_branch
      %15 = sbr.rel (0) target = $region9
    $region8: #{tpu_custom_call.1} parent=1 // pred_region
      _
    $region9: #{tpu_custom_call.1} parent=1 // pred_fallthru
      _
    // Predicated region
    $region10: #{tpu_custom_call.1} parent=1 // pred_check
      _
    $region11: #{tpu_custom_call.1} parent=1 // pred_check_branch
      %17 = sbr.rel (0) target = $region13
    $region12: #{tpu_custom_call.1} parent=1 // pred_region
      _
    $region13: #{tpu_custom_call.1} parent=1 // pred_fallthru
      _
    // Predicated region
    $region14: #{tpu_custom_call.1} parent=1 // pred_check
      _
    $region15: #{tpu_custom_call.1} parent=1 // pred_check_branch
      %19 = sbr.rel (0) target = $region17
    $region16: #{tpu_custom_call.1} parent=1 // pred_region
      _
    $region17: #{tpu_custom_call.1} parent=1 // pred_fallthru
      _
    // Predicated region
    $region18: #{tpu_custom_call.1} parent=1 // pred_check
      _
    $region19: #{tpu_custom_call.1} parent=1 // pred_check_branch
      %21 = sbr.rel (0) target = $region21
    $region20: #{tpu_custom_call.1} parent=1 // pred_region
      _
    $region21: #{tpu_custom_call.1} parent=1 // pred_fallthru
      _
    // Predicated region
    $region22: #{tpu_custom_call.1} parent=1 // pred_check
      _
    $region23: #{tpu_custom_call.1} parent=1 // pred_check_branch
      %23 = sbr.rel (0) target = $region25
    $region24: #{tpu_custom_call.1} parent=1 // pred_region
      _
    $region25: #{tpu_custom_call.1} parent=1 // pred_fallthru
      _
    %p24 = scmp.eq.s32.totalorder 0, 0
    // Predicated region
    $region26: #{tpu_custom_call.1} parent=1 // pred_check
      %p25 = pneg %p24
    $region27: #{tpu_custom_call.1} parent=1 // pred_check_branch
      %27 = sbr.rel (%p25) target = $region29
    $region28: #{tpu_custom_call.1} parent=1 // pred_region
      %vm28 = vcmask 261120
      %29 = vst.msk [vmem:[#allocation2] sm:$0xff] %vm28, 0.0
      %30 = vst.msk [vmem:[#allocation2 + $0x8] sm:$0xff] %vm28, 0.0
    $region29: #{tpu_custom_call.1} parent=1 // pred_fallthru
      _
    %v31 = vld [vmem:[#allocation2] sm:$0xff]
    %v32 = vld [vmem:[#allocation2 + $0x8] sm:$0xff]
    %v33 = vld [vmem:[%s0] sm:$0xf]
    %v34 = vld [vmem:[%s0 + $0x4] sm:$0xf]
    %v35 = vld [vmem:[%s2] sm:$0xf]
    %v36 = vld [vmem:[%s2 + $0x4] sm:$0xf]
    %v37 = vld [vmem:[%s2 + $0x8] sm:$0xf]
    %v38 = vld [vmem:[%s2 + $0xc] sm:$0xf]
    %v39 = vld [vmem:[%s2 + $0x10] sm:$0xf]
    %v40 = vld [vmem:[%s2 + $0x14] sm:$0xf]
    %v41 = vld [vmem:[%s2 + $0x18] sm:$0xf]
    %v42 = vld [vmem:[%s2 + $0x1c] sm:$0xf]
    %v43 = vld [vmem:[%s2 + $0x20] sm:$0xf]
    %v44 = vld [vmem:[%s2 + $0x24] sm:$0xf]
    %v45 = vld [vmem:[%s2 + $0x28] sm:$0xf]
    %v46 = vld [vmem:[%s2 + $0x2c] sm:$0xf]
    %v47 = vld [vmem:[%s2 + $0x30] sm:$0xf]
    %v48 = vld [vmem:[%s2 + $0x34] sm:$0xf]
    %v49 = vld [vmem:[%s2 + $0x38] sm:$0xf]
    %v50 = vld [vmem:[%s2 + $0x3c] sm:$0xf]
    %v53 = vunpack.c.l.b16 %v33
    %v54 = vunpack.c.l.b16 %v34
    %v55 = vpack.c.b16 %v54, %v53
    %v73 = vunpack.c.l.b16 %v35
    %v74 = vunpack.c.l.b16 %v36
    %v75 = vunpack.c.l.b16 %v37
    %v76 = vunpack.c.l.b16 %v38
    %v77 = vunpack.c.l.b16 %v39
    %v78 = vunpack.c.l.b16 %v40
    %v79 = vunpack.c.l.b16 %v41
    %v80 = vunpack.c.l.b16 %v42
    %v81 = vunpack.c.l.b16 %v43
    %v82 = vunpack.c.l.b16 %v44
    %v83 = vunpack.c.l.b16 %v45
    %v84 = vunpack.c.l.b16 %v46
    %v85 = vunpack.c.l.b16 %v47
    %v86 = vunpack.c.l.b16 %v48
    %v87 = vunpack.c.l.b16 %v49
    %v88 = vunpack.c.l.b16 %v50
    %v89 = vpack.c.b16 %v74, %v73
    %v90 = vpack.c.b16 %v76, %v75
    %v91 = vpack.c.b16 %v78, %v77
    %v92 = vpack.c.b16 %v80, %v79
    %v93 = vpack.c.b16 %v82, %v81
    %v94 = vpack.c.b16 %v84, %v83
    %v95 = vpack.c.b16 %v86, %v85
    %v96 = vpack.c.b16 %v88, %v87
    %105 = vmatpush.bf16.msra.mxu0 %v96
    %106 = vmatpush.bf16.msra.mxu0 %v95
    %107 = vmatpush.bf16.msra.mxu0 %v94
    %108 = vmatpush.bf16.msra.mxu0 %v93
    %109 = vmatpush.bf16.msra.mxu0 %v92
    %110 = vmatpush.bf16.msra.mxu0 %v91
    %111 = vmatpush.bf16.msra.mxu0 %v90
    %112 = vmatpush.bf16.msra.mxu0 %v89
    %113 = vmatmul.bf16.gmra.mxu0 %v55
    %v114 = vpop.f32.mrf.mxu0
    %v115 = vadd.f32 0.0, %v114
    %v116 = vpop.f32.mrf.mxu0
    %v117 = vadd.f32 0.0, %v116
    %118 = vdwg.mxu0
    %v119 = vadd.f32 %v31, %v115
    %v120 = vadd.f32 %v32, %v117
    %vm121 = vcmask 261120
    %122 = vst.msk [vmem:[#allocation2] sm:$0xff] %vm121, %v119
    %123 = vst.msk [vmem:[#allocation2 + $0x8] sm:$0xff] %vm121, %v120
    // Predicated region
    $region30: #{tpu_custom_call.1} parent=1 // pred_check
      %p124 = pneg %p24
    $region31: #{tpu_custom_call.1} parent=1 // pred_check_branch
      %126 = sbr.rel (%p124) target = $region33
    $region32: #{tpu_custom_call.1} parent=1 // pred_region
      %v127 = vld [vmem:[#allocation2] sm:$0xff]
      %v128 = vld [vmem:[#allocation2 + $0x8] sm:$0xff]
      %v129 = vld [vmem:[%s3] sm:$0x1]
      %v131 = vperm.slane %v129, 0
      %v133 = vadd.f32 %v127, %v131
      %v134 = vadd.f32 %v128, %v131
      %v135 = vld [vmem:[%s1] sm:$0xff]
      %v136 = vld [vmem:[%s1 + $0x8] sm:$0xff]
      %v137 = vadd.f32 %v133, %v135
      %v138 = vadd.f32 %v134, %v136
      %v139 = vsel %vm121, %v137, 0.0
      %140 = vadd.xlane.f32.xlu0 %v139
      %v141 = vpop.xlane.xlu0 %140
      %v142 = vsel %vm121, %v138, 0.0
      %143 = vadd.xlane.f32.xlu0 %v142
      %v144 = vpop.xlane.xlu0 %143
      %v145 = vmul.f32 %v137, %v137
      %v146 = vmul.f32 %v138, %v138
      %v147 = vsel %vm121, %v145, 0.0
      %148 = vadd.xlane.f32.xlu0 %v147
      %v149 = vpop.xlane.xlu0 %148
      %v150 = vsel %vm121, %v146, 0.0
      %151 = vadd.xlane.f32.xlu0 %v150
      %v152 = vpop.xlane.xlu0 %151
      %v153 = vmul.f32 %v141, 0.03125
      %v154 = vmul.f32 %v144, 0.03125
      %v155 = vmul.f32 %v149, 0.03125
      %v156 = vmul.f32 %v152, 0.03125
      %v157 = vmul.f32 %v153, %v153
      %v158 = vmul.f32 %v154, %v154
      %v159 = vsub.f32 %v155, %v157
      %v160 = vsub.f32 %v156, %v158
      %v161 = vmax.f32 %v159, 0.0
      %v162 = vmax.f32 %v160, 0.0
      %v163 = vsub.f32 %v137, %v153
      %v164 = vsub.f32 %v138, %v154
      %v165 = vadd.f32 %v161, 1e-12
      %v166 = vadd.f32 %v162, 1e-12
      %v167 = vrsqrt.pop %v165
      %v168 = vmul.f32 %v167, %v165
      %v169 = vmul.f32 %v168, %v167
      %v170 = vmul.f32 0.5, %v169
      %v171 = vsub.f32 1.5, %v170
      %v172 = vmul.f32 %v167, %v171
      %vm173 = vweird.f32 %v165
      %vm174 = vweird.f32 %v167
      %vm175 = vmor %vm173, %vm174
      %v176 = vsel %vm175, %v167, %v172
      %v177 = vrsqrt.pop %v166
      %v178 = vmul.f32 %v177, %v166
      %v179 = vmul.f32 %v178, %v177
      %v180 = vmul.f32 0.5, %v179
      %v181 = vsub.f32 1.5, %v180
      %v182 = vmul.f32 %v177, %v181
      %vm183 = vweird.f32 %v166
      %vm184 = vweird.f32 %v177
      %vm185 = vmor %vm183, %vm184
      %v186 = vsel %vm185, %v177, %v182
      %v187 = vmul.f32 %v163, %v176
      %v188 = vmul.f32 %v164, %v186
      %v189 = vld [vmem:[%s4] sm:$0x1]
      %v191 = vperm.slane %v189, 0
      %v193 = vmul.f32 %v187, %v191
      %v194 = vmul.f32 %v188, %v191
      %v195 = vld [vmem:[%s5] sm:$0x1]
      %v197 = vperm.slane %v195, 0
      %v199 = vadd.f32 %v193, %v197
      %v200 = vadd.f32 %v194, %v197
      %201 = vst.msk [vmem:[#allocation3] sm:$0xff] %vm121, %v199
      %202 = vst.msk [vmem:[#allocation3 + $0x8] sm:$0xff] %vm121, %v200
    $region33: #{tpu_custom_call.1} parent=1 // pred_fallthru
      _
    // Predicated region
    $region34: #{tpu_custom_call.1} parent=1 // pred_check
      _
    $region35: #{tpu_custom_call.1} parent=1 // pred_check_branch
      %204 = sbr.rel (0) target = $region37
    $region36: #{tpu_custom_call.1} parent=1 // pred_region
      %206 = vsyncadd [#allocation4], 0
      %s207 = sshll.u32 [#allocation3], 4
      %s208 = int_to_ptr.vmem [resolvable:$true] %s207
      %s209 = sshll.u32 %s6, 4
      %s210 = int_to_ptr.hbm [resolvable:$true] %s209
      %215 = dma.vmem_to_hbm [thread:$0]  %s208, 256, %s210, [#allocation4], 128, 128, 8
    $region37: #{tpu_custom_call.1} parent=1 // pred_fallthru
      _
    // Predicated region
    $region38: #{tpu_custom_call.1} parent=1 // pred_check
      _
    $region39: #{tpu_custom_call.1} parent=1 // pred_check_branch
      %217 = sbr.rel (0) target = $region41
    $region40: #{tpu_custom_call.1} parent=1 // pred_region
      %219 = dma.done [#allocation4], 256
    $region41: #{tpu_custom_call.1} parent=1 // pred_fallthru
      _
    %220 = vsyncpa [#allocation4], 1

</llo_original>
